<compile_context>
chip_gen: v7x
topology: tpu7x:2x2x1
jax: 0.10.0
libtpu: 0.0.40
codegen_flags: <defaults>
</compile_context>

<pallas_src>
import functools
import math

import jax
import jax.numpy as jnp
from jax import lax
from jax.experimental import pallas as pl
from jax.experimental.pallas import tpu as pltpu


_VMEM_LIMIT_BYTES = 48 * 1024 * 1024  # < v7x 64 MiB physical; raises v5e's 16 MiB default


# --------------------------------------------------------------------------
# Tiling helpers
# --------------------------------------------------------------------------

def _round_up(x, m):
    return ((x + m - 1) // m) * m


def _m_tiling(M, max_tile=512):
    """Row tiling: prefer the largest multiple-of-8 divisor of M (no pad / slice
    HBM round trips); otherwise fall back to padding M up to a tile multiple."""
    cap = min(max_tile, _round_up(M, 8))
    cap -= cap % 8
    for t in range(cap, 7, -8):
        if M % t == 0:
            return t, M
    return cap, _round_up(M, cap)


def _choose_n_tile(N, max_tile=512):
    """Lane-dense output tile: full N if small, else an MXU-friendly divisor
    (512/256/128 — no 384, which half-fills the 256-wide MXU on v6e/v7x)."""
    if N <= max_tile:
        return N
    for t in (512, 256, 128):
        if N % t == 0:
            return t
    return N


def _pad_rows(x, mp):
    M = x.shape[0]
    if mp == M:
        return x
    return jnp.pad(x, ((0, mp - M), (0, 0)))


def _cparams(dimension_semantics):
    return pltpu.CompilerParams(dimension_semantics=dimension_semantics,
                                vmem_limit_bytes=_VMEM_LIMIT_BYTES)


# --------------------------------------------------------------------------
# Pallas kernels
# --------------------------------------------------------------------------

def _ln_linear_kernel(x_ref, g_ref, bln_ref, w_ref, b_ref, o_ref, xn_ref, *,
                      eps, activation):
    """y = act( LayerNorm(x) @ W + b ).  LN computed once per row tile (j == 0),
    cached as bf16 in VMEM scratch, reused for every output column tile."""
    @pl.when(pl.program_id(1) == 0)
    def _():
        x = x_ref[...].astype(jnp.float32)                       # [tm, K]
        d = x.shape[-1]
        mean = jnp.mean(x, axis=-1, keepdims=True)
        # Annotated-Transformer LayerNorm: unbiased std (ddof=1), eps added to std.
        var = jnp.sum((x - mean) ** 2, axis=-1, keepdims=True) / (d - 1)
        std = jnp.sqrt(var)
        xn = g_ref[...] * (x - mean) / (std + eps) + bln_ref[...]
        xn_ref[...] = xn.astype(jnp.bfloat16)

    y = jnp.dot(xn_ref[...], w_ref[...], preferred_element_type=jnp.float32)
    y = y + b_ref[...]
    if activation == "relu":
        y = jnp.maximum(y, 0.0)
    o_ref[...] = y.astype(o_ref.dtype)


def pallas_ln_linear(x, gamma, beta, w, b, activation=None, eps=1e-6,
                     out_dtype=jnp.bfloat16):
    """Fused pre-norm + linear.  x: [M, K] f32 (residual stream), w: [K, N] bf16,
    b: [N] f32.  Output is bf16 (pure matmul input downstream)."""
    M, K = x.shape
    N = w.shape[1]
    tm, Mp = _m_tiling(M)
    tn = _choose_n_tile(N)
    xp = _pad_rows(x, Mp)
    kern = functools.partial(_ln_linear_kernel, eps=eps, activation=activation)
    y = pl.pallas_call(
        kern,
        out_shape=jax.ShapeDtypeStruct((Mp, N), out_dtype),
        grid=(Mp // tm, N // tn),
        in_specs=[
            pl.BlockSpec((tm, K), lambda i, j: (i, 0)),
            pl.BlockSpec((1, K), lambda i, j: (0, 0)),
            pl.BlockSpec((1, K), lambda i, j: (0, 0)),
            pl.BlockSpec((K, tn), lambda i, j: (0, j)),
            pl.BlockSpec((1, tn), lambda i, j: (0, j)),
        ],
        out_specs=pl.BlockSpec((tm, tn), lambda i, j: (i, j)),
        scratch_shapes=[pltpu.VMEM((tm, K), jnp.bfloat16)],
        compiler_params=_cparams(("parallel", "arbitrary")),
    )(xp, gamma.reshape(1, K), beta.reshape(1, K), w, b.reshape(1, N))
    return y[:M] if Mp != M else y


def _linear_res_kernel(x_ref, w_ref, b_ref, r_ref, o_ref):
    """y = residual + x @ W + b  (residual add fused; bf16 matmul, f32 accum)."""
    x = x_ref[...]
    if x.dtype != jnp.bfloat16:
        x = x.astype(jnp.bfloat16)
    y = jnp.dot(x, w_ref[...], preferred_element_type=jnp.float32)
    y = y + b_ref[...] + r_ref[...].astype(jnp.float32)
    o_ref[...] = y.astype(o_ref.dtype)


def pallas_linear_residual(x, w, b, residual):
    """x: [M, K] bf16 activations, w: [K, N] bf16, b: [N] f32, residual: [M, N] f32.
    Returns the f32 residual stream."""
    M, K = x.shape
    N = w.shape[1]
    tm, Mp = _m_tiling(M)
    tn = _choose_n_tile(N)
    xp = _pad_rows(x, Mp)
    rp = _pad_rows(residual, Mp)
    y = pl.pallas_call(
        _linear_res_kernel,
        out_shape=jax.ShapeDtypeStruct((Mp, N), jnp.float32),
        grid=(Mp // tm, N // tn),
        in_specs=[
            pl.BlockSpec((tm, K), lambda i, j: (i, 0)),
            pl.BlockSpec((K, tn), lambda i, j: (0, j)),
            pl.BlockSpec((1, tn), lambda i, j: (0, j)),
            pl.BlockSpec((tm, tn), lambda i, j: (i, j)),
        ],
        out_specs=pl.BlockSpec((tm, tn), lambda i, j: (i, j)),
        compiler_params=_cparams(("parallel", "parallel")),
    )(xp, w, b.reshape(1, N), rp)
    return y[:M] if Mp != M else y


def _layernorm_kernel(x_ref, g_ref, b_ref, o_ref, *, eps):
    x = x_ref[...].astype(jnp.float32)
    d = x.shape[-1]
    mean = jnp.mean(x, axis=-1, keepdims=True)
    var = jnp.sum((x - mean) ** 2, axis=-1, keepdims=True) / (d - 1)
    std = jnp.sqrt(var)
    y = g_ref[...] * (x - mean) / (std + eps) + b_ref[...]
    o_ref[...] = y.astype(o_ref.dtype)


def pallas_layernorm(x, gamma, beta, eps=1e-6):
    """Final LayerNorm over [B, S, D] with large row tiles; f32 model output."""
    B, S, D = x.shape
    M = B * S
    tm, Mp = _m_tiling(M)
    xp = _pad_rows(x.reshape(M, D), Mp)
    kern = functools.partial(_layernorm_kernel, eps=eps)
    y = pl.pallas_call(
        kern,
        out_shape=jax.ShapeDtypeStruct((Mp, D), jnp.float32),
        grid=(Mp // tm,),
        in_specs=[
            pl.BlockSpec((tm, D), lambda i: (i, 0)),
            pl.BlockSpec((1, D), lambda i: (0, 0)),
            pl.BlockSpec((1, D), lambda i: (0, 0)),
        ],
        out_specs=pl.BlockSpec((tm, D), lambda i: (i, 0)),
        compiler_params=_cparams(("parallel",)),
    )(xp, gamma.reshape(1, D), beta.reshape(1, D))
    y = y[:M] if Mp != M else y
    return y.reshape(B, S, D)


def _attention_kernel(qkv_ref, bias_ref, o_ref, *, n_heads):
    """All heads of one batch element.  qkv is packed [S, 3D] bf16 (1/sqrt(dk)
    already folded into the Q weights); the mask is a precomputed additive bias
    [1, S] hoisted above the head loop.  Each head's output goes straight into
    its o_ref column slice (no concat; live set bounded to one head)."""
    D3 = qkv_ref.shape[-1]
    D = D3 // 3
    dk = D // n_heads
    bias = bias_ref[0].astype(jnp.float32)                    # [1, S] -> broadcast over queries
    for h in range(n_heads):
        lo = h * dk
        qh = qkv_ref[0, :, lo:lo + dk]                        # [S, dk] bf16
        kh = qkv_ref[0, :, D + lo:D + lo + dk]
        vh = qkv_ref[0, :, 2 * D + lo:2 * D + lo + dk]
        # q @ k^T via dot_general contracting last dims (no explicit transpose).
        s = lax.dot_general(qh, kh, (((1,), (1,)), ((), ())),
                            preferred_element_type=jnp.float32)       # [S, S]
        s = s + bias
        s = s - jnp.max(s, axis=-1, keepdims=True)
        p = jnp.exp(s)
        p = p * pl.reciprocal(jnp.sum(p, axis=-1, keepdims=True), approx=True)
        oh = jnp.dot(p.astype(jnp.bfloat16), vh,
                     preferred_element_type=jnp.float32)              # [S, dk]
        o_ref[0, :, lo:lo + dk] = oh.astype(o_ref.dtype)


def pallas_attention(qkv, bias, n_heads):
    """qkv: [B, S, 3D] bf16 (packed Q|K|V, Q pre-scaled), bias: [B, 1, S] f32.
    Returns bf16 [B, S, D] (pure matmul input for the output projection)."""
    B, S, D3 = qkv.shape
    D = D3 // 3
    kern = functools.partial(_attention_kernel, n_heads=n_heads)
    # TODO(synk): for long S (>~2K on v7x / >~4K on v6e) switch to flash-style KV
    # tiling (query-tile grid axis + m/l/acc scratch) so the f32 [S,S] scores are
    # never materialized and megacore has work even when B is small.
    return pl.pallas_call(
        kern,
        out_shape=jax.ShapeDtypeStruct((B, S, D), jnp.bfloat16),
        grid=(B,),
        in_specs=[
            pl.BlockSpec((1, S, D3), lambda b: (b, 0, 0)),
            pl.BlockSpec((1, 1, S), lambda b: (b, 0, 0)),
        ],
        out_specs=pl.BlockSpec((1, S, D), lambda b: (b, 0, 0)),
        compiler_params=_cparams(("parallel",)),
    )(qkv, bias)


# --------------------------------------------------------------------------
# Model glue (plain JAX: reshapes only; no transposes / separate residual adds)
# --------------------------------------------------------------------------

def encoder_layer_forward(x, bias, lp, h):
    # Pre-norm sublayer connections: x + sublayer(norm(x)).
    # TODO(synk): dropout inside the sublayer connections is omitted (eval-mode identity).
    B, S, D = x.shape
    x2 = x.reshape(B * S, D)

    # Sublayer 1: LN -> fused QKV projection -> attention -> out-proj (+residual)
    qkv = pallas_ln_linear(x2, lp["ln1_g"], lp["ln1_b"], lp["wqkv"], lp["bqkv"])   # bf16 [M, 3D]
    attn = pallas_attention(qkv.reshape(B, S, 3 * D), bias, h)                      # bf16 [B, S, D]
    x2 = pallas_linear_residual(attn.reshape(B * S, D), lp["wo"], lp["bo"], x2)     # f32

    # Sublayer 2: LN -> FFN first linear (fused ReLU) -> second linear (+residual)
    # TODO(synk): medium-term, fuse the whole FFN (LN->W1->ReLU->W2->+res) with a
    # d_ff reduction grid axis so the [M, d_ff] hidden never touches HBM.
    h1 = pallas_ln_linear(x2, lp["ln2_g"], lp["ln2_b"], lp["w1"], lp["b1"],
                          activation="relu")                                        # bf16 [M, d_ff]
    x2 = pallas_linear_residual(h1, lp["w2"], lp["b2"], x2)                          # f32
    return x2.reshape(B, S, D)


def encoder_forward(x, mask, params):
    # The mask is identical for every layer and head: convert it ONCE to an
    # additive bias (0 where attend, -1e9 where masked).
    bias = jnp.where(mask > 0, 0.0, -1e9).astype(jnp.float32)     # [B, 1, S]
    for lp in params["layers"]:
        x = encoder_layer_forward(x, bias, lp, params["h"])
    return pallas_layernorm(x, params["final_g"], params["final_b"])


# --------------------------------------------------------------------------
# Deterministic parameter init (synthetic; no checkpoint loading)
# Weights are stored bf16 (MXU-native); biases / LN params stay f32.
# --------------------------------------------------------------------------

def _dense_init(key, fan_in, fan_out):
    kw, kb = jax.random.split(key)
    bound = 1.0 / math.sqrt(fan_in)
    w = jax.random.uniform(kw, (fan_in, fan_out), jnp.float32, -bound, bound)
    b = jax.random.uniform(kb, (fan_out,), jnp.float32, -bound, bound)
    return w, b


def init_params(key, hidden_dim, h, n, d_ff):
    dk = hidden_dim // h
    scale = 1.0 / math.sqrt(dk)
    keys = jax.random.split(key, n)
    layers = []
    for i in range(n):
        ks = jax.random.split(keys[i], 6)
        wq, bq = _dense_init(ks[0], hidden_dim, hidden_dim)
        wk, bk = _dense_init(ks[1], hidden_dim, hidden_dim)
        wv, bv = _dense_init(ks[2], hidden_dim, hidden_dim)
        wo, bo = _dense_init(ks[3], hidden_dim, hidden_dim)
        w1, b1 = _dense_init(ks[4], hidden_dim, d_ff)
        w2, b2 = _dense_init(ks[5], d_ff, hidden_dim)
        # Fold 1/sqrt(dk) into the Q projection (weights + bias): the attention
        # kernel never multiplies by the scale.
        wq = wq * scale
        bq = bq * scale
        layers.append(dict(
            wqkv=jnp.concatenate([wq, wk, wv], axis=1).astype(jnp.bfloat16),
            bqkv=jnp.concatenate([bq, bk, bv], axis=0),
            wo=wo.astype(jnp.bfloat16), bo=bo,
            w1=w1.astype(jnp.bfloat16), b1=b1,
            w2=w2.astype(jnp.bfloat16), b2=b2,
            ln1_g=jnp.ones((hidden_dim,), jnp.float32),
            ln1_b=jnp.zeros((hidden_dim,), jnp.float32),
            ln2_g=jnp.ones((hidden_dim,), jnp.float32),
            ln2_b=jnp.zeros((hidden_dim,), jnp.float32),
        ))
    return dict(
        layers=layers, h=h,
        final_g=jnp.ones((hidden_dim,), jnp.float32),
        final_b=jnp.zeros((hidden_dim,), jnp.float32),
    )


# --------------------------------------------------------------------------

if __name__ == "__main__":
    # Small shapes consistent with the module's forward: x [B, S, D], mask [B, 1, S].
    B, S, D = 2, 8, 32
    H, N_LAYERS = 4, 2
    D_FF = 4 * D  # standard position-wise FFN width

    key = jax.random.PRNGKey(0)
    k_x, k_p = jax.random.split(key)
    x = jax.random.normal(k_x, (B, S, D), jnp.float32)
    mask = jnp.ones((B, 1, S), jnp.float32).at[1, 0, 6:].set(0.0)  # mask last 2 keys of batch 1

    params = init_params(k_p, D, H, N_LAYERS, D_FF)

    out = encoder_forward(x, mask, params)
    out = jax.block_until_ready(out)
    assert out.shape == (B, S, D) and out.dtype == jnp.float32
    assert bool(jnp.all(jnp.isfinite(out)))
    print("KERNEL_OK")
</pallas_src>

<mosaic_0001>
module attributes {stable_mosaic.version = 11 : i64} {
  func.func @_ln_linear_kernel(%arg0: i32, %arg1: i32, %arg2: memref<16x32xf32, #tpu.memory_space<vmem>>, %arg3: memref<1x32xf32, #tpu.memory_space<vmem>>, %arg4: memref<1x32xf32, #tpu.memory_space<vmem>>, %arg5: memref<32x96xbf16, #tpu.memory_space<vmem>>, %arg6: memref<1x96xf32, #tpu.memory_space<vmem>>, %arg7: memref<16x96xbf16, #tpu.memory_space<vmem>>, %arg8: memref<16x32xbf16, #tpu.memory_space<vmem>>) attributes {dimension_semantics = [#tpu.dimension_semantics<parallel>, #tpu.dimension_semantics<arbitrary>], iteration_bounds = array<i64: 1, 1>, scalar_prefetch = 0 : i64, scratch_operands = 1 : i64, tpu.core_type = #tpu.core_type<tc>, window_params = [{transform_indices = @transform_0, window_bounds = array<i64: 16, 32>}, {pipeline_mode = #tpu.pipeline_mode<synchronous>, transform_indices = @transform_1, window_bounds = array<i64: 1, 32>}, {pipeline_mode = #tpu.pipeline_mode<synchronous>, transform_indices = @transform_2, window_bounds = array<i64: 1, 32>}, {transform_indices = @transform_3, window_bounds = array<i64: 32, 96>}, {transform_indices = @transform_4, window_bounds = array<i64: 1, 96>}, {transform_indices = @transform_5, window_bounds = array<i64: 16, 96>}]} {
    %c0_i32 = arith.constant 0 : i32
    %0 = arith.cmpi eq, %arg1, %c0_i32 : i32
    %1 = arith.extui %0 : i1 to i32
    %c0_i32_0 = arith.constant 0 : i32
    %2 = arith.cmpi ne, %1, %c0_i32_0 : i32
    scf.if %2 {
      %c0_8 = arith.constant 0 : index
      %c0_9 = arith.constant 0 : index
      %11 = vector.load %arg2[%c0_8, %c0_9] : memref<16x32xf32, #tpu.memory_space<vmem>>, vector<16x32xf32>
      %cst_10 = arith.constant dense<0.000000e+00> : vector<16xf32>
      %12 = vector.multi_reduction <add>, %11, %cst_10 [1] : vector<16x32xf32> to vector<16xf32>
      %13 = vector.shape_cast %12 : vector<16xf32> to vector<16x1xf32>
      %cst_11 = arith.constant 3.200000e+01 : f32
      %14 = vector.broadcast %cst_11 : f32 to vector<16x1xf32>
      %15 = arith.divf %13, %14 : vector<16x1xf32>
      %16 = vector.broadcast %15 : vector<16x1xf32> to vector<16x32xf32>
      %17 = arith.subf %11, %16 : vector<16x32xf32>
      %18 = arith.mulf %17, %17 : vector<16x32xf32>
      %cst_12 = arith.constant dense<0.000000e+00> : vector<16xf32>
      %19 = vector.multi_reduction <add>, %18, %cst_12 [1] : vector<16x32xf32> to vector<16xf32>
      %20 = vector.shape_cast %19 : vector<16xf32> to vector<16x1xf32>
      %cst_13 = arith.constant 3.100000e+01 : f32
      %21 = vector.broadcast %cst_13 : f32 to vector<16x1xf32>
      %22 = arith.divf %20, %21 : vector<16x1xf32>
      %23 = math.sqrt %22 : vector<16x1xf32>
      %c0_14 = arith.constant 0 : index
      %c0_15 = arith.constant 0 : index
      %24 = vector.load %arg3[%c0_14, %c0_15] : memref<1x32xf32, #tpu.memory_space<vmem>>, vector<1x32xf32>
      %25 = vector.broadcast %15 : vector<16x1xf32> to vector<16x32xf32>
      %26 = arith.subf %11, %25 : vector<16x32xf32>
      %27 = vector.broadcast %24 : vector<1x32xf32> to vector<16x32xf32>
      %28 = arith.mulf %27, %26 : vector<16x32xf32>
      %cst_16 = arith.constant 9.99999997E-7 : f32
      %29 = vector.broadcast %cst_16 : f32 to vector<16x1xf32>
      %30 = arith.addf %23, %29 : vector<16x1xf32>
      %31 = vector.broadcast %30 : vector<16x1xf32> to vector<16x32xf32>
      %32 = arith.divf %28, %31 : vector<16x32xf32>
      %c0_17 = arith.constant 0 : index
      %c0_18 = arith.constant 0 : index
      %33 = vector.load %arg4[%c0_17, %c0_18] : memref<1x32xf32, #tpu.memory_space<vmem>>, vector<1x32xf32>
      %34 = vector.broadcast %33 : vector<1x32xf32> to vector<16x32xf32>
      %35 = arith.addf %32, %34 : vector<16x32xf32>
      %36 = arith.truncf %35 : vector<16x32xf32> to vector<16x32xbf16>
      %c0_19 = arith.constant 0 : index
      %c0_20 = arith.constant 0 : index
      %37 = vector.load %arg8[%c0_19, %c0_20] : memref<16x32xbf16, #tpu.memory_space<vmem>>, vector<16x32xbf16>
      tpu.vector_store %arg8[%c0_19, %c0_20], %36 {strides = array<i32>} : memref<16x32xbf16, #tpu.memory_space<vmem>>, vector<16x32xbf16>,
    } else {
    }
    %c0 = arith.constant 0 : index
    %c0_1 = arith.constant 0 : index
    %3 = vector.load %arg8[%c0, %c0_1] : memref<16x32xbf16, #tpu.memory_space<vmem>>, vector<16x32xbf16>
    %c0_2 = arith.constant 0 : index
    %c0_3 = arith.constant 0 : index
    %4 = vector.load %arg5[%c0_2, %c0_3] : memref<32x96xbf16, #tpu.memory_space<vmem>>, vector<32x96xbf16>
    %cst = arith.constant dense<0.000000e+00> : vector<16x96xf32>
    %5 = tpu.matmul %3, %4, %cst {dimension_numbers = #tpu.dot_dimension_numbers<[1], [0], [0], [1], [0, 0, 1, 1], [], []>} : vector<16x32xbf16>, vector<32x96xbf16>, vector<16x96xf32> -> vector<16x96xf32>
    %c0_4 = arith.constant 0 : index
    %c0_5 = arith.constant 0 : index
    %6 = vector.load %arg6[%c0_4, %c0_5] : memref<1x96xf32, #tpu.memory_space<vmem>>, vector<1x96xf32>
    %7 = vector.broadcast %6 : vector<1x96xf32> to vector<16x96xf32>
    %8 = arith.addf %5, %7 : vector<16x96xf32>
    %9 = arith.truncf %8 : vector<16x96xf32> to vector<16x96xbf16>
    %c0_6 = arith.constant 0 : index
    %c0_7 = arith.constant 0 : index
    %10 = vector.load %arg7[%c0_6, %c0_7] : memref<16x96xbf16, #tpu.memory_space<vmem>>, vector<16x96xbf16>
    tpu.vector_store %arg7[%c0_6, %c0_7], %9 {strides = array<i32>} : memref<16x96xbf16, #tpu.memory_space<vmem>>, vector<16x96xbf16>,
    return
  }
  func.func @transform_0(%arg0: i32, %arg1: i32) -> (i32, i32) {
    %c0_i32 = arith.constant 0 : i32
    %c0_i32_0 = arith.constant 0 : i32
    return %arg0, %c0_i32 : i32, i32
  }
  func.func @transform_1(%arg0: i32, %arg1: i32) -> (i32, i32) {
    %c0_i32 = arith.constant 0 : i32
    %c0_i32_0 = arith.constant 0 : i32
    %c0_i32_1 = arith.constant 0 : i32
    return %c0_i32, %c0_i32_0 : i32, i32
  }
  func.func @transform_2(%arg0: i32, %arg1: i32) -> (i32, i32) {
    %c0_i32 = arith.constant 0 : i32
    %c0_i32_0 = arith.constant 0 : i32
    %c0_i32_1 = arith.constant 0 : i32
    return %c0_i32, %c0_i32_0 : i32, i32
  }
  func.func @transform_3(%arg0: i32, %arg1: i32) -> (i32, i32) {
    %c0_i32 = arith.constant 0 : i32
    %c0_i32_0 = arith.constant 0 : i32
    return %c0_i32, %arg1 : i32, i32
  }
  func.func @transform_4(%arg0: i32, %arg1: i32) -> (i32, i32) {
    %c0_i32 = arith.constant 0 : i32
    %c0_i32_0 = arith.constant 0 : i32
    return %c0_i32, %arg1 : i32, i32
  }
  func.func @transform_5(%arg0: i32, %arg1: i32) -> (i32, i32) {
    %c0_i32 = arith.constant 0 : i32
    return %arg0, %arg1 : i32, i32
  }
}

</mosaic_0001>

<llo_original>
// kernel: tpu_custom_call.1
$region0: #{tpu_custom_call.1}
  #allocation0 [shape = 'u32[]', space=smem, size = 0x4, offset = 0x4, fixed_abs, tag = 'smem constant byte address 0x4 - core index']
  #allocation1 [shape = 'u32[144,128]{1,0:T(1,128)}', space=vmem, size = 0x12000, scoped, tag = 'internal scratch']
  #allocation2 [shape = 'bf16[16,32]{1,0:T(16,128)(2,1)}', space=vmem, size = 0x1000, scoped, tag = 'scratch operand']
  %s0 = inlined_call_operand.hbm [shape: f32[16,32], index: 0, kind: input, shape index: {}]
  %s1 = inlined_call_operand.vmem [shape: f32[1,32], index: 1, kind: input, shape index: {}]
  %s2 = inlined_call_operand.vmem [shape: f32[1,32], index: 2, kind: input, shape index: {}]
  %s3 = inlined_call_operand.hbm [shape: bf16[32,96], index: 3, kind: input, shape index: {}]
  %s4 = inlined_call_operand.vmem [shape: f32[1,96], index: 4, kind: input, shape index: {}]
  %s5 = inlined_call_operand.hbm [shape: bf16[16,96], index: 5, kind: output, shape index: {}]
  %s6 = sld [smem:[#allocation0]]
  $region42: #{tpu_custom_call.1} parent=0
    _
  %s8 = ssub.s32 1, %s6
  %s9 = scalar_select 0, %s8, %s6
  $region1: #{tpu_custom_call.1} parent=0
    #allocation3 [shape = 'u8[8192]{0}', space=vmem, size = 0x2000, scoped, tag = 'input window, operand 0, single buffered']
    #allocation4 [shape = 's32[1]{0}', space=sflag, size = 0x4, scoped, tag = 'scoped memory for tpu_custom_call.1']
    #allocation5 [shape = 's32[1]{0}', space=sflag, size = 0x4, scoped, tag = 'scoped memory for tpu_custom_call.1']
    #allocation6 [shape = 'u8[8192]{0}', space=vmem, size = 0x2000, scoped, tag = 'input window, operand 3, single buffered']
    #allocation7 [shape = 's32[1]{0}', space=sflag, size = 0x4, scoped, tag = 'scoped memory for tpu_custom_call.1']
    #allocation8 [shape = 'u8[4096]{0}', space=vmem, size = 0x1000, scoped, tag = 'output window, operand 0, single buffered']
    %10 = vsyncpa [#allocation4], 0
    %11 = vsyncpa [#allocation7], 0
    %12 = vsyncpa [#allocation5], 0
    // Predicated region
    $region2: #{tpu_custom_call.1} parent=1 // pred_check
      _
    $region3: #{tpu_custom_call.1} parent=1 // pred_check_branch
      %14 = sbr.rel (0) target = $region5
    $region4: #{tpu_custom_call.1} parent=1 // pred_region
      %s16 = ssub.s32 256, 256
      %17 = vsyncadd [#allocation4], %s16
      %s18 = sshll.u32 [#allocation3], 4
      %s19 = int_to_ptr.vmem [resolvable:$true] %s18
      %24 = dma.hbm_to_vmem [thread:$0]  %s0, 256, %s19, [#allocation4], 128, 128, 8
    $region5: #{tpu_custom_call.1} parent=1 // pred_fallthru
      _
    // Predicated region
    $region6: #{tpu_custom_call.1} parent=1 // pred_check
      _
    $region7: #{tpu_custom_call.1} parent=1 // pred_check_branch
      %26 = sbr.rel (0) target = $region9
    $region8: #{tpu_custom_call.1} parent=1 // pred_region
      _
    $region9: #{tpu_custom_call.1} parent=1 // pred_fallthru
      _
    // Predicated region
    $region10: #{tpu_custom_call.1} parent=1 // pred_check
      _
    $region11: #{tpu_custom_call.1} parent=1 // pred_check_branch
      %28 = sbr.rel (0) target = $region13
    $region12: #{tpu_custom_call.1} parent=1 // pred_region
      _
    $region13: #{tpu_custom_call.1} parent=1 // pred_fallthru
      _
    // Predicated region
    $region14: #{tpu_custom_call.1} parent=1 // pred_check
      _
    $region15: #{tpu_custom_call.1} parent=1 // pred_check_branch
      %30 = sbr.rel (0) target = $region17
    $region16: #{tpu_custom_call.1} parent=1 // pred_region
      %s32 = ssub.s32 256, 256
      %33 = vsyncadd [#allocation7], %s32
      %s34 = sshll.u32 [#allocation6], 4
      %s35 = int_to_ptr.vmem [resolvable:$true] %s34
      %40 = dma.hbm_to_vmem [thread:$0]  %s3, 256, %s35, [#allocation7], 64, 64, 4
    $region17: #{tpu_custom_call.1} parent=1 // pred_fallthru
      _
    // Predicated region
    $region18: #{tpu_custom_call.1} parent=1 // pred_check
      _
    $region19: #{tpu_custom_call.1} parent=1 // pred_check_branch
      %42 = sbr.rel (0) target = $region21
    $region20: #{tpu_custom_call.1} parent=1 // pred_region
      _
    $region21: #{tpu_custom_call.1} parent=1 // pred_fallthru
      _
    // Predicated region
    $region22: #{tpu_custom_call.1} parent=1 // pred_check
      _
    $region23: #{tpu_custom_call.1} parent=1 // pred_check_branch
      %44 = sbr.rel (0) target = $region25
    $region24: #{tpu_custom_call.1} parent=1 // pred_region
      %45 = dma.done [#allocation4], 256
    $region25: #{tpu_custom_call.1} parent=1 // pred_fallthru
      _
    // Predicated region
    $region26: #{tpu_custom_call.1} parent=1 // pred_check
      _
    $region27: #{tpu_custom_call.1} parent=1 // pred_check_branch
      %47 = sbr.rel (0) target = $region29
    $region28: #{tpu_custom_call.1} parent=1 // pred_region
      %48 = dma.done [#allocation7], 256
    $region29: #{tpu_custom_call.1} parent=1 // pred_fallthru
      _
    %p50 = scmp.eq.s32.totalorder 0, 0
    // Predicated region
    $region30: #{tpu_custom_call.1} parent=1 // pred_check
      %p51 = pneg %p50
    $region31: #{tpu_custom_call.1} parent=1 // pred_check_branch
      %53 = sbr.rel (%p51) target = $region33
    $region32: #{tpu_custom_call.1} parent=1 // pred_region
      %v54 = vld [vmem:[#allocation3] sm:$0xff]
      %v55 = vld [vmem:[#allocation3 + $0x8] sm:$0xff]
      %vm56 = vcmask 261120
      %v57 = vsel %vm56, %v54, 0.0
      %58 = vadd.xlane.f32.xlu0 %v57
      %v59 = vpop.xlane.xlu0 %58
      %v60 = vsel %vm56, %v55, 0.0
      %61 = vadd.xlane.f32.xlu0 %v60
      %v62 = vpop.xlane.xlu0 %61
      %v63 = vrcp.pop 32.0
      %v64 = vmul.f32 %v59, %v63
      %v65 = vmul.f32 %v62, %v63
      %v66 = vsub.f32 %v54, %v64
      %v67 = vsub.f32 %v55, %v65
      %v68 = vmul.f32 %v66, %v66
      %v69 = vmul.f32 %v67, %v67
      %v70 = vsel %vm56, %v68, 0.0
      %71 = vadd.xlane.f32.xlu0 %v70
      %v72 = vpop.xlane.xlu0 %71
      %v73 = vsel %vm56, %v69, 0.0
      %74 = vadd.xlane.f32.xlu0 %v73
      %v75 = vpop.xlane.xlu0 %74
      %v76 = vrcp.pop 31.0
      %v77 = vmul.f32 %v72, %v76
      %v78 = vmul.f32 %v75, %v76
      %v79 = vrsqrt.pop %v77
      %v80 = vmul.f32 %v77, %v79
      %vm81 = vcmp.eq.f32.partialorder %v77, inf
      %v82 = vsel %vm81, %v77, %v80
      %vm83 = vcmp.eq.f32.partialorder %v77, 0.0
      %v84 = vand.u32 %v77, 2147483648
      %v85 = vsel %vm83, %v84, %v82
      %v86 = vrsqrt.pop %v78
      %v87 = vmul.f32 %v78, %v86
      %vm88 = vcmp.eq.f32.partialorder %v78, inf
      %v89 = vsel %vm88, %v78, %v87
      %vm90 = vcmp.eq.f32.partialorder %v78, 0.0
      %v91 = vand.u32 %v78, 2147483648
      %v92 = vsel %vm90, %v91, %v89
      %v93 = vld [vmem:[%s1] sm:$0x1]
      %v95 = vlaneseq
      %v96 = vshrl.u32 %v95, 7
      %v97 = vsub.s32 0, %v96
      %v98 = vrot.slane %v93, %v97
      %v100 = vmul.f32 %v98, %v66
      %v101 = vmul.f32 %v98, %v67
      %v102 = vadd.f32 %v85, 1e-06
      %v103 = vadd.f32 %v92, 1e-06
      %v104 = vrcp.pop %v102
      %v105 = vmul.f32 %v100, %v104
      %v106 = vrcp.pop %v103
      %v107 = vmul.f32 %v101, %v106
      %v108 = vld [vmem:[%s2] sm:$0x1]
      %v110 = vlaneseq
      %v111 = vshrl.u32 %v110, 7
      %v112 = vsub.s32 0, %v111
      %v113 = vrot.slane %v108, %v112
      %v115 = vadd.f32 %v105, %v113
      %v116 = vadd.f32 %v107, %v113
      %v117 = vpack.c.bf16 %v116, %v115
      %118 = vst.msk [vmem:[#allocation2] sm:$0xff] %vm56, %v117
    $region33: #{tpu_custom_call.1} parent=1 // pred_fallthru
      _
    %v119 = vld [vmem:[#allocation2] sm:$0xff]
    %v120 = vld [vmem:[#allocation6] sm:$0xf]
    %v121 = vld [vmem:[#allocation6 + $0x4] sm:$0xf]
    %v122 = vld [vmem:[#allocation6 + $0x8] sm:$0xf]
    %v123 = vld [vmem:[#allocation6 + $0xc] sm:$0xf]
    %v124 = vld [vmem:[%s4] sm:$0x1]
    %v126 = vlaneseq
    %v127 = vshrl.u32 %v126, 7
    %v128 = vsub.s32 0, %v127
    %v129 = vrot.slane %v124, %v128
    %v135 = vunpack.c.l.b16 %v120
    %v136 = vunpack.c.l.b16 %v121
    %v137 = vunpack.c.l.b16 %v122
    %v138 = vunpack.c.l.b16 %v123
    %v139 = vpack.c.b16 %v136, %v135
    %v140 = vpack.c.b16 %v138, %v137
    %vm143 = vcmask 261120
    %v145 = vsel %vm143, %v119, 0
    %147 = vmatprep.subr.bf16.mxu0 0
    %148 = vmatpush1.bf16.msra.mxu0 %v139
    %149 = vmatprep.subr.bf16.mxu0 0
    %150 = vmatpush1.bf16.msra.mxu0 %v140
    %151 = vmatprep.subr.bf16.mxu0 0
    %152 = vmatpush1.bf16.msra.mxu0 0
    %153 = vmatprep.subr.bf16.mxu0 0
    %154 = vmatpush1.bf16.msra.mxu0 0
    %155 = vmatprep.subr.bf16.mxu0 0
    %156 = vmatpush1.bf16.msra.mxu0 0
    %157 = vmatprep.subr.bf16.mxu0 0
    %158 = vmatpush1.bf16.msra.mxu0 0
    %159 = vmatprep.subr.bf16.mxu0 0
    %160 = vmatpush1.bf16.msra.mxu0 0
    %161 = vmatprep.subr.bf16.mxu0 0
    %162 = vmatpush1.bf16.msra.mxu0 0
    %163 = vmatprep.subr.bf16.mxu0 0
    %164 = vmatpush1.bf16.msra.mxu0 0
    %165 = vmatprep.subr.bf16.mxu0 0
    %166 = vmatpush1.bf16.msra.mxu0 0
    %167 = vmatprep.subr.bf16.mxu0 0
    %168 = vmatpush1.bf16.msra.mxu0 0
    %169 = vmatprep.subr.bf16.mxu0 0
    %170 = vmatpush1.bf16.msra.mxu0 0
    %171 = vmatprep.subr.bf16.mxu0 0
    %172 = vmatpush1.bf16.msra.mxu0 0
    %173 = vmatprep.subr.bf16.mxu0 0
    %174 = vmatpush1.bf16.msra.mxu0 0
    %175 = vmatprep.subr.bf16.mxu0 0
    %176 = vmatpush1.bf16.msra.mxu0 0
    %177 = vmatprep.subr.bf16.mxu0 0
    %178 = vmatpush1.bf16.msra.mxu0 0
    %179 = vmatprep.mubr.bf16.mxu0 0
    %180 = vmatmul.mubr.bf16.gmra.mrb[0].mxu0 %v145
    %v181 = vpop.f32.mrb[0].mxu0
    %v182 = vadd.f32 %v129, %v181
    %v183 = vpop.f32.mrb[0].mxu0
    %v184 = vpop.f32.mrb[0].mxu0
    %v185 = vadd.f32 %v129, %v184
    %v186 = vpop.f32.mrb[0].mxu0
    %187 = vdwg.mxu0
    %v188 = vpack.c.bf16 %v185, %v182
    %v190 = vunpack.c.l.b16 %v188
    %v191 = vunpack.c.h.b16 %v188
    %v192 = vpack.c.b16 %v190, %v190
    %v193 = vpack.c.b16 %v191, %v191
    %vm196 = vcmask 781312
    %197 = vst.msk [vmem:[#allocation8] sm:$0xf] %vm196, %v192
    %198 = vst.msk [vmem:[#allocation8 + $0x4] sm:$0xf] %vm196, %v193
    // Predicated region
    $region34: #{tpu_custom_call.1} parent=1 // pred_check
      _
    $region35: #{tpu_custom_call.1} parent=1 // pred_check_branch
      %200 = sbr.rel (0) target = $region37
    $region36: #{tpu_custom_call.1} parent=1 // pred_region
      %s202 = ssub.s32 128, 128
      %203 = vsyncadd [#allocation5], %s202
      %s204 = sshll.u32 [#allocation8], 4
      %s205 = int_to_ptr.vmem [resolvable:$true] %s204
      %210 = dma.vmem_to_hbm [thread:$0]  %s205, 128, %s5, [#allocation5], 64, 64, 4
    $region37: #{tpu_custom_call.1} parent=1 // pred_fallthru
      _
    // Predicated region
    $region38: #{tpu_custom_call.1} parent=1 // pred_check
      _
    $region39: #{tpu_custom_call.1} parent=1 // pred_check_branch
      %212 = sbr.rel (0) target = $region41
    $region40: #{tpu_custom_call.1} parent=1 // pred_region
      %213 = dma.done [#allocation5], 128
    $region41: #{tpu_custom_call.1} parent=1 // pred_fallthru
      _
    %214 = vsyncpa [#allocation4], 1
    %215 = vsyncpa [#allocation7], 1
    %216 = vsyncpa [#allocation5], 1

</llo_original>
